<compile_context>
chip_gen: v6e
topology: v6e:2x2x1
jax: 0.10.0
libtpu: 0.0.40
codegen_flags: <defaults>
</compile_context>

<pallas_src>
import functools

import jax
import jax.numpy as jnp
from jax import lax
from jax.experimental import pallas as pl
from jax.experimental.pallas import tpu as pltpu


LN_EPS = 1e-5   # torch.nn.LayerNorm default
LANE = 128      # TPU lane width; all operands padded to this last-dim width


def _round_up(x, m):
    return ((x + m - 1) // m) * m


# --------------------------------------------------------------------------- #
# Fused kernel: entire two-head MLP in one invocation, one packed param slab.
# --------------------------------------------------------------------------- #
def make_fused_network_kernel(layer_dims, feature_dim, lane):
    """Kernel closure over static layer dims / slab row offsets."""
    layer_dims = tuple(int(d) for d in layer_dims)

    def kernel(x_ref, p_ref, o_ref):
        h = x_ref[...].astype(jnp.float32)            # (B, feature_dim)
        batch = h.shape[0]

        # Hoisted: lane index grid, reused for every layer's masks.
        lane_idx = lax.broadcasted_iota(jnp.int32, (batch, lane), 1)

        off = 0
        for l, d in enumerate(layer_dims):
            # ---- fetch this layer's packed weight + (bias, gamma, beta) ----
            if l == 0:
                w = p_ref[off:off + feature_dim, :]   # (feature_dim, lane)
                off += _round_up(feature_dim, 8)
            else:
                w = p_ref[off:off + lane, :]          # (lane, lane), block-diag
                off += lane
            bgb = p_ref[off:off + 3, :]               # rows: bias/gamma/beta
            off += 8
            bias = bgb[0:1, :]
            gamma = bgb[1:2, :]
            beta = bgb[2:3, :]

            # ---- one MXU matmul produces both heads ----
            y = jnp.dot(h.astype(jnp.float32), w.astype(jnp.float32),
                        preferred_element_type=jnp.float32) + bias

            # ---- full-width masked per-head LayerNorm + ReLU (VPU only) ----
            is_pi = lane_idx < d
            is_vf = jnp.logical_and(lane_idx >= d, lane_idx < 2 * d)
            valid = lane_idx < 2 * d
            inv_d = 1.0 / float(d)

            mean_pi = jnp.sum(jnp.where(is_pi, y, 0.0), axis=-1,
                              keepdims=True) * inv_d
            mean_vf = jnp.sum(jnp.where(is_vf, y, 0.0), axis=-1,
                              keepdims=True) * inv_d
            mean = jnp.where(is_pi, mean_pi, mean_vf)

            centered = y - mean
            c2 = centered * centered
            var_pi = jnp.sum(jnp.where(is_pi, c2, 0.0), axis=-1,
                             keepdims=True) * inv_d
            var_vf = jnp.sum(jnp.where(is_vf, c2, 0.0), axis=-1,
                             keepdims=True) * inv_d
            var = jnp.where(is_pi, var_pi, var_vf)

            normed = centered * lax.rsqrt(var + LN_EPS) * gamma + beta
            # Dropout (eval) = identity; activation_fn = ReLU; zero pad lanes.
            h = jnp.where(valid, jnp.maximum(normed, 0.0), 0.0)

        o_ref[...] = h.astype(o_ref.dtype)            # lane-dense (B, 128)

    return kernel


# --------------------------------------------------------------------------- #
# Host-side one-time packing: all layers into one (rows, 128) f32 slab.
# --------------------------------------------------------------------------- #
def pack_param_slab(pi_params, vf_params, feature_dim):
    """Fuse both heads' (w, b, gamma, beta) for all layers into one slab."""
    assert len(pi_params) == len(vf_params), "fused path needs equal depth"
    layer_dims = tuple(int(w.shape[1]) for (w, _, _, _) in pi_params)
    lane = max(LANE, _round_up(2 * max(layer_dims), LANE))

    blocks = []
    for l, ((wp, bp, gp, bep), (wv, bv, gv, bev)) in enumerate(
        zip(pi_params, vf_params)
    ):
        assert wp.shape == wv.shape, "fused path needs equal pi/vf layer dims"
        d_in, d = wp.shape
        if l == 0:
            r_w = _round_up(feature_dim, 8)
            w_block = jnp.zeros((r_w, lane), jnp.float32)
            w_block = w_block.at[:d_in, :d].set(wp)        # shared input
            w_block = w_block.at[:d_in, d:2 * d].set(wv)
        else:
            r_w = lane
            w_block = jnp.zeros((r_w, lane), jnp.float32)  # block-diagonal
            w_block = w_block.at[:d_in, :d].set(wp)
            w_block = w_block.at[d_in:2 * d_in, d:2 * d].set(wv)
        blocks.append(w_block)

        bgb = jnp.zeros((8, lane), jnp.float32)
        bgb = bgb.at[0, :d].set(bp).at[0, d:2 * d].set(bv)     # bias
        bgb = bgb.at[1, :d].set(gp).at[1, d:2 * d].set(gv)     # LN weight
        bgb = bgb.at[2, :d].set(bep).at[2, d:2 * d].set(bev)   # LN bias
        blocks.append(bgb)

    slab = jnp.concatenate(blocks, axis=0)
    return slab, layer_dims, lane


# --------------------------------------------------------------------------- #
# Jitted forward wrapper: one pallas_call, two operands.
# --------------------------------------------------------------------------- #
def make_forward_fn(layer_dims, feature_dim, lane):
    kernel = make_fused_network_kernel(layer_dims, feature_dim, lane)
    d_last = int(layer_dims[-1])
    vmem = pl.BlockSpec(memory_space=pltpu.MemorySpace.VMEM)

    @jax.jit
    def forward(features, param_slab):
        batch = features.shape[0]
        out = pl.pallas_call(
            kernel,
            out_shape=jax.ShapeDtypeStruct((batch, lane), jnp.float32),
            in_specs=[vmem, vmem],
            out_specs=vmem,
        )(features.astype(jnp.float32), param_slab)
        latent_pi = out[:, :d_last]
        latent_vf = out[:, d_last:2 * d_last]
        return latent_pi, latent_vf

    return forward


# --------------------------------------------------------------------------- #
# Parameter init + pure-JAX reference.
# --------------------------------------------------------------------------- #
def init_mlp_params(key, feature_dim, layer_dims):
    """Deterministic init mimicking torch defaults (uniform fan_in bound)."""
    params = []
    d_in = feature_dim
    for d_out in layer_dims:
        key, kw, kb = jax.random.split(key, 3)
        bound = 1.0 / jnp.sqrt(jnp.float32(d_in))
        w = jax.random.uniform(kw, (d_in, d_out), jnp.float32, -bound, bound)
        b = jax.random.uniform(kb, (d_out,), jnp.float32, -bound, bound)
        gamma = jnp.ones((d_out,), jnp.float32)   # LayerNorm weight
        beta = jnp.zeros((d_out,), jnp.float32)   # LayerNorm bias
        params.append((w, b, gamma, beta))
        d_in = d_out
    return params, key


def reference_forward(features, pi_params, vf_params):
    """Pure-JAX reference for correctness checking (eval-mode module)."""
    def net(h, params):
        for (w, b, g, be) in params:
            y = h @ w + b
            mean = jnp.mean(y, axis=-1, keepdims=True)
            var = jnp.mean((y - mean) ** 2, axis=-1, keepdims=True)
            y = (y - mean) / jnp.sqrt(var + LN_EPS)
            y = y * g + be
            h = jnp.maximum(y, 0.0)
        return h
    return net(features, pi_params), net(features, vf_params)


if __name__ == "__main__":
    # Small, module-consistent shapes: feature_dim=32, net_arch=[32, 32], batch=8.
    batch = 8
    feature_dim = 32
    net_arch = [32, 32]

    key = jax.random.PRNGKey(0)
    key, kx = jax.random.split(key)
    features = jax.random.normal(kx, (batch, feature_dim), jnp.float32)

    pi_params, key = init_mlp_params(key, feature_dim, net_arch)
    vf_params, key = init_mlp_params(key, feature_dim, net_arch)

    # One-time init: pack params into a single slab, build the jitted forward.
    param_slab, layer_dims, lane = pack_param_slab(pi_params, vf_params,
                                                   feature_dim)
    param_slab = jax.block_until_ready(param_slab)
    forward = make_forward_fn(layer_dims, feature_dim, lane)

    latent_pi, latent_vf = forward(features, param_slab)
    jax.block_until_ready((latent_pi, latent_vf))

    ref_pi, ref_vf = reference_forward(features, pi_params, vf_params)
    assert latent_pi.shape == (batch, net_arch[-1])
    assert latent_vf.shape == (batch, net_arch[-1])
    assert jnp.allclose(latent_pi, ref_pi, atol=1e-4, rtol=1e-4)
    assert jnp.allclose(latent_vf, ref_vf, atol=1e-4, rtol=1e-4)

    print("KERNEL_OK")
</pallas_src>

<mosaic_0001>
module attributes {stable_mosaic.version = 11 : i64} {
  func.func @kernel(%arg0: memref<8x32xf32, #tpu.memory_space<vmem>>, %arg1: memref<176x128xf32, #tpu.memory_space<vmem>>, %arg2: memref<8x128xf32, #tpu.memory_space<vmem>>) attributes {dimension_semantics = [], scalar_prefetch = 0 : i64, scratch_operands = 0 : i64, tpu.core_type = #tpu.core_type<tc>} {
    %c0 = arith.constant 0 : index
    %c0_0 = arith.constant 0 : index
    %0 = vector.load %arg0[%c0, %c0_0] : memref<8x32xf32, #tpu.memory_space<vmem>>, vector<8x32xf32>
    %1 = tpu.iota {dimensions = array<i32: 1>} : vector<8x128xi32>
    %c0_1 = arith.constant 0 : index
    %c0_2 = arith.constant 0 : index
    %2 = vector.load %arg1[%c0_1, %c0_2] : memref<176x128xf32, #tpu.memory_space<vmem>>, vector<32x128xf32>
    %c32 = arith.constant 32 : index
    %c0_3 = arith.constant 0 : index
    %3 = vector.load %arg1[%c32, %c0_3] : memref<176x128xf32, #tpu.memory_space<vmem>>, vector<3x128xf32>
    %4 = vector.extract_strided_slice %3 {offsets = [0, 0], sizes = [1, 128], strides = [1, 1]} : vector<3x128xf32> to vector<1x128xf32>
    %5 = vector.extract_strided_slice %3 {offsets = [1, 0], sizes = [1, 128], strides = [1, 1]} : vector<3x128xf32> to vector<1x128xf32>
    %6 = vector.extract_strided_slice %3 {offsets = [2, 0], sizes = [1, 128], strides = [1, 1]} : vector<3x128xf32> to vector<1x128xf32>
    %cst = arith.constant dense<0.000000e+00> : vector<8x128xf32>
    %7 = tpu.matmul %0, %2, %cst {dimension_numbers = #tpu.dot_dimension_numbers<[1], [0], [0], [1], [0, 0, 1, 1], [], []>} : vector<8x32xf32>, vector<32x128xf32>, vector<8x128xf32> -> vector<8x128xf32>
    %8 = vector.broadcast %4 : vector<1x128xf32> to vector<8x128xf32>
    %9 = arith.addf %7, %8 : vector<8x128xf32>
    %c32_i32 = arith.constant 32 : i32
    %10 = vector.broadcast %c32_i32 : i32 to vector<8x128xi32>
    %11 = arith.cmpi slt, %1, %10 : vector<8x128xi32>
    %c32_i32_4 = arith.constant 32 : i32
    %12 = vector.broadcast %c32_i32_4 : i32 to vector<8x128xi32>
    %13 = arith.cmpi sge, %1, %12 : vector<8x128xi32>
    %c64_i32 = arith.constant 64 : i32
    %14 = vector.broadcast %c64_i32 : i32 to vector<8x128xi32>
    %15 = arith.cmpi slt, %1, %14 : vector<8x128xi32>
    %16 = arith.andi %13, %15 : vector<8x128xi1>
    %c64_i32_5 = arith.constant 64 : i32
    %17 = vector.broadcast %c64_i32_5 : i32 to vector<8x128xi32>
    %18 = arith.cmpi slt, %1, %17 : vector<8x128xi32>
    %cst_6 = arith.constant 0.000000e+00 : f32
    %19 = vector.broadcast %cst_6 : f32 to vector<8x128xf32>
    %20 = arith.select %11, %9, %19 : vector<8x128xi1>, vector<8x128xf32>
    %cst_7 = arith.constant dense<0.000000e+00> : vector<8xf32>
    %21 = vector.multi_reduction <add>, %20, %cst_7 [1] : vector<8x128xf32> to vector<8xf32>
    %22 = vector.shape_cast %21 : vector<8xf32> to vector<8x1xf32>
    %cst_8 = arith.constant 3.125000e-02 : f32
    %23 = vector.broadcast %cst_8 : f32 to vector<8x1xf32>
    %24 = arith.mulf %22, %23 : vector<8x1xf32>
    %cst_9 = arith.constant 0.000000e+00 : f32
    %25 = vector.broadcast %cst_9 : f32 to vector<8x128xf32>
    %26 = arith.select %16, %9, %25 : vector<8x128xi1>, vector<8x128xf32>
    %cst_10 = arith.constant dense<0.000000e+00> : vector<8xf32>
    %27 = vector.multi_reduction <add>, %26, %cst_10 [1] : vector<8x128xf32> to vector<8xf32>
    %28 = vector.shape_cast %27 : vector<8xf32> to vector<8x1xf32>
    %cst_11 = arith.constant 3.125000e-02 : f32
    %29 = vector.broadcast %cst_11 : f32 to vector<8x1xf32>
    %30 = arith.mulf %28, %29 : vector<8x1xf32>
    %31 = vector.shape_cast %24 : vector<8x1xf32> to vector<8x1xf32>
    %32 = vector.broadcast %31 : vector<8x1xf32> to vector<8x128xf32>
    %33 = vector.shape_cast %30 : vector<8x1xf32> to vector<8x1xf32>
    %34 = vector.broadcast %33 : vector<8x1xf32> to vector<8x128xf32>
    %35 = arith.select %11, %32, %34 : vector<8x128xi1>, vector<8x128xf32>
    %36 = arith.subf %9, %35 : vector<8x128xf32>
    %37 = arith.mulf %36, %36 : vector<8x128xf32>
    %cst_12 = arith.constant 0.000000e+00 : f32
    %38 = vector.broadcast %cst_12 : f32 to vector<8x128xf32>
    %39 = arith.select %11, %37, %38 : vector<8x128xi1>, vector<8x128xf32>
    %cst_13 = arith.constant dense<0.000000e+00> : vector<8xf32>
    %40 = vector.multi_reduction <add>, %39, %cst_13 [1] : vector<8x128xf32> to vector<8xf32>
    %41 = vector.shape_cast %40 : vector<8xf32> to vector<8x1xf32>
    %cst_14 = arith.constant 3.125000e-02 : f32
    %42 = vector.broadcast %cst_14 : f32 to vector<8x1xf32>
    %43 = arith.mulf %41, %42 : vector<8x1xf32>
    %cst_15 = arith.constant 0.000000e+00 : f32
    %44 = vector.broadcast %cst_15 : f32 to vector<8x128xf32>
    %45 = arith.select %16, %37, %44 : vector<8x128xi1>, vector<8x128xf32>
    %cst_16 = arith.constant dense<0.000000e+00> : vector<8xf32>
    %46 = vector.multi_reduction <add>, %45, %cst_16 [1] : vector<8x128xf32> to vector<8xf32>
    %47 = vector.shape_cast %46 : vector<8xf32> to vector<8x1xf32>
    %cst_17 = arith.constant 3.125000e-02 : f32
    %48 = vector.broadcast %cst_17 : f32 to vector<8x1xf32>
    %49 = arith.mulf %47, %48 : vector<8x1xf32>
    %50 = vector.shape_cast %43 : vector<8x1xf32> to vector<8x1xf32>
    %51 = vector.broadcast %50 : vector<8x1xf32> to vector<8x128xf32>
    %52 = vector.shape_cast %49 : vector<8x1xf32> to vector<8x1xf32>
    %53 = vector.broadcast %52 : vector<8x1xf32> to vector<8x128xf32>
    %54 = arith.select %11, %51, %53 : vector<8x128xi1>, vector<8x128xf32>
    %cst_18 = arith.constant 9.99999974E-6 : f32
    %55 = vector.broadcast %cst_18 : f32 to vector<8x128xf32>
    %56 = arith.addf %54, %55 : vector<8x128xf32>
    %57 = math.rsqrt %56 : vector<8x128xf32>
    %58 = arith.mulf %36, %57 : vector<8x128xf32>
    %59 = vector.broadcast %5 : vector<1x128xf32> to vector<8x128xf32>
    %60 = arith.mulf %58, %59 : vector<8x128xf32>
    %61 = vector.broadcast %6 : vector<1x128xf32> to vector<8x128xf32>
    %62 = arith.addf %60, %61 : vector<8x128xf32>
    %cst_19 = arith.constant 0.000000e+00 : f32
    %63 = vector.broadcast %cst_19 : f32 to vector<8x128xf32>
    %64 = arith.maximumf %62, %63 : vector<8x128xf32>
    %cst_20 = arith.constant 0.000000e+00 : f32
    %65 = vector.broadcast %cst_20 : f32 to vector<8x128xf32>
    %66 = arith.select %18, %64, %65 : vector<8x128xi1>, vector<8x128xf32>
    %c40 = arith.constant 40 : index
    %c0_21 = arith.constant 0 : index
    %67 = vector.load %arg1[%c40, %c0_21] : memref<176x128xf32, #tpu.memory_space<vmem>>, vector<128x128xf32>
    %c168 = arith.constant 168 : index
    %c0_22 = arith.constant 0 : index
    %68 = vector.load %arg1[%c168, %c0_22] : memref<176x128xf32, #tpu.memory_space<vmem>>, vector<3x128xf32>
    %69 = vector.extract_strided_slice %68 {offsets = [0, 0], sizes = [1, 128], strides = [1, 1]} : vector<3x128xf32> to vector<1x128xf32>
    %70 = vector.extract_strided_slice %68 {offsets = [1, 0], sizes = [1, 128], strides = [1, 1]} : vector<3x128xf32> to vector<1x128xf32>
    %71 = vector.extract_strided_slice %68 {offsets = [2, 0], sizes = [1, 128], strides = [1, 1]} : vector<3x128xf32> to vector<1x128xf32>
    %cst_23 = arith.constant dense<0.000000e+00> : vector<8x128xf32>
    %72 = tpu.matmul %66, %67, %cst_23 {dimension_numbers = #tpu.dot_dimension_numbers<[1], [0], [0], [1], [0, 0, 1, 1], [], []>} : vector<8x128xf32>, vector<128x128xf32>, vector<8x128xf32> -> vector<8x128xf32>
    %73 = vector.broadcast %69 : vector<1x128xf32> to vector<8x128xf32>
    %74 = arith.addf %72, %73 : vector<8x128xf32>
    %c32_i32_24 = arith.constant 32 : i32
    %75 = vector.broadcast %c32_i32_24 : i32 to vector<8x128xi32>
    %76 = arith.cmpi slt, %1, %75 : vector<8x128xi32>
    %c32_i32_25 = arith.constant 32 : i32
    %77 = vector.broadcast %c32_i32_25 : i32 to vector<8x128xi32>
    %78 = arith.cmpi sge, %1, %77 : vector<8x128xi32>
    %c64_i32_26 = arith.constant 64 : i32
    %79 = vector.broadcast %c64_i32_26 : i32 to vector<8x128xi32>
    %80 = arith.cmpi slt, %1, %79 : vector<8x128xi32>
    %81 = arith.andi %78, %80 : vector<8x128xi1>
    %c64_i32_27 = arith.constant 64 : i32
    %82 = vector.broadcast %c64_i32_27 : i32 to vector<8x128xi32>
    %83 = arith.cmpi slt, %1, %82 : vector<8x128xi32>
    %cst_28 = arith.constant 0.000000e+00 : f32
    %84 = vector.broadcast %cst_28 : f32 to vector<8x128xf32>
    %85 = arith.select %76, %74, %84 : vector<8x128xi1>, vector<8x128xf32>
    %cst_29 = arith.constant dense<0.000000e+00> : vector<8xf32>
    %86 = vector.multi_reduction <add>, %85, %cst_29 [1] : vector<8x128xf32> to vector<8xf32>
    %87 = vector.shape_cast %86 : vector<8xf32> to vector<8x1xf32>
    %cst_30 = arith.constant 3.125000e-02 : f32
    %88 = vector.broadcast %cst_30 : f32 to vector<8x1xf32>
    %89 = arith.mulf %87, %88 : vector<8x1xf32>
    %cst_31 = arith.constant 0.000000e+00 : f32
    %90 = vector.broadcast %cst_31 : f32 to vector<8x128xf32>
    %91 = arith.select %81, %74, %90 : vector<8x128xi1>, vector<8x128xf32>
    %cst_32 = arith.constant dense<0.000000e+00> : vector<8xf32>
    %92 = vector.multi_reduction <add>, %91, %cst_32 [1] : vector<8x128xf32> to vector<8xf32>
    %93 = vector.shape_cast %92 : vector<8xf32> to vector<8x1xf32>
    %cst_33 = arith.constant 3.125000e-02 : f32
    %94 = vector.broadcast %cst_33 : f32 to vector<8x1xf32>
    %95 = arith.mulf %93, %94 : vector<8x1xf32>
    %96 = vector.shape_cast %89 : vector<8x1xf32> to vector<8x1xf32>
    %97 = vector.broadcast %96 : vector<8x1xf32> to vector<8x128xf32>
    %98 = vector.shape_cast %95 : vector<8x1xf32> to vector<8x1xf32>
    %99 = vector.broadcast %98 : vector<8x1xf32> to vector<8x128xf32>
    %100 = arith.select %76, %97, %99 : vector<8x128xi1>, vector<8x128xf32>
    %101 = arith.subf %74, %100 : vector<8x128xf32>
    %102 = arith.mulf %101, %101 : vector<8x128xf32>
    %cst_34 = arith.constant 0.000000e+00 : f32
    %103 = vector.broadcast %cst_34 : f32 to vector<8x128xf32>
    %104 = arith.select %76, %102, %103 : vector<8x128xi1>, vector<8x128xf32>
    %cst_35 = arith.constant dense<0.000000e+00> : vector<8xf32>
    %105 = vector.multi_reduction <add>, %104, %cst_35 [1] : vector<8x128xf32> to vector<8xf32>
    %106 = vector.shape_cast %105 : vector<8xf32> to vector<8x1xf32>
    %cst_36 = arith.constant 3.125000e-02 : f32
    %107 = vector.broadcast %cst_36 : f32 to vector<8x1xf32>
    %108 = arith.mulf %106, %107 : vector<8x1xf32>
    %cst_37 = arith.constant 0.000000e+00 : f32
    %109 = vector.broadcast %cst_37 : f32 to vector<8x128xf32>
    %110 = arith.select %81, %102, %109 : vector<8x128xi1>, vector<8x128xf32>
    %cst_38 = arith.constant dense<0.000000e+00> : vector<8xf32>
    %111 = vector.multi_reduction <add>, %110, %cst_38 [1] : vector<8x128xf32> to vector<8xf32>
    %112 = vector.shape_cast %111 : vector<8xf32> to vector<8x1xf32>
    %cst_39 = arith.constant 3.125000e-02 : f32
    %113 = vector.broadcast %cst_39 : f32 to vector<8x1xf32>
    %114 = arith.mulf %112, %113 : vector<8x1xf32>
    %115 = vector.shape_cast %108 : vector<8x1xf32> to vector<8x1xf32>
    %116 = vector.broadcast %115 : vector<8x1xf32> to vector<8x128xf32>
    %117 = vector.shape_cast %114 : vector<8x1xf32> to vector<8x1xf32>
    %118 = vector.broadcast %117 : vector<8x1xf32> to vector<8x128xf32>
    %119 = arith.select %76, %116, %118 : vector<8x128xi1>, vector<8x128xf32>
    %cst_40 = arith.constant 9.99999974E-6 : f32
    %120 = vector.broadcast %cst_40 : f32 to vector<8x128xf32>
    %121 = arith.addf %119, %120 : vector<8x128xf32>
    %122 = math.rsqrt %121 : vector<8x128xf32>
    %123 = arith.mulf %101, %122 : vector<8x128xf32>
    %124 = vector.broadcast %70 : vector<1x128xf32> to vector<8x128xf32>
    %125 = arith.mulf %123, %124 : vector<8x128xf32>
    %126 = vector.broadcast %71 : vector<1x128xf32> to vector<8x128xf32>
    %127 = arith.addf %125, %126 : vector<8x128xf32>
    %cst_41 = arith.constant 0.000000e+00 : f32
    %128 = vector.broadcast %cst_41 : f32 to vector<8x128xf32>
    %129 = arith.maximumf %127, %128 : vector<8x128xf32>
    %cst_42 = arith.constant 0.000000e+00 : f32
    %130 = vector.broadcast %cst_42 : f32 to vector<8x128xf32>
    %131 = arith.select %83, %129, %130 : vector<8x128xi1>, vector<8x128xf32>
    %c0_43 = arith.constant 0 : index
    %c0_44 = arith.constant 0 : index
    %132 = vector.load %arg2[%c0_43, %c0_44] : memref<8x128xf32, #tpu.memory_space<vmem>>, vector<8x128xf32>
    tpu.vector_store %arg2[%c0_43, %c0_44], %131 {strides = array<i32>} : memref<8x128xf32, #tpu.memory_space<vmem>>, vector<8x128xf32>,
    return
  }
}

</mosaic_0001>

<llo_original>
// kernel: forward.1
$region0: #{forward.1}
  #allocation0 [shape = 'u32[]', space=smem, size = 0x4, offset = 0x4, fixed_abs, tag = 'smem constant byte address 0x4 - core index']
  #allocation1 [shape = 'u32[144,128]{1,0:T(1,128)}', space=vmem, size = 0x12000, scoped, tag = 'internal scratch']
  %s0 = inlined_call_operand.hbm [shape: f32[8,32], index: 0, kind: input, shape index: {}]
  %s1 = inlined_call_operand.hbm [shape: f32[176,128], index: 1, kind: input, shape index: {}]
  %s2 = inlined_call_operand.vmem [shape: f32[8,128], index: 2, kind: output, shape index: {}]
  %s3 = sld [smem:[#allocation0]]
  $region26: #{forward.1} parent=0
    _
  %s5 = ssub.s32 1, %s3
  %s6 = scalar_select 0, %s5, %s3
  $region1: #{forward.1} parent=0
    #allocation2 [shape = 'u8[4096]{0}', space=vmem, size = 0x1000, scoped, tag = 'input window, operand 0, single buffered']
    #allocation3 [shape = 's32[1]{0}', space=sflag, size = 0x4, scoped, tag = 'scoped memory for forward.1']
    #allocation4 [shape = 'u8[90112]{0}', space=vmem, size = 0x16000, scoped, tag = 'input window, operand 1, single buffered']
    #allocation5 [shape = 's32[1]{0}', space=sflag, size = 0x4, scoped, tag = 'scoped memory for forward.1']
    %7 = vsyncpa [#allocation3], 0
    %8 = vsyncpa [#allocation5], 0
    // Predicated region
    $region2: #{forward.1} parent=1 // pred_check
      _
    $region3: #{forward.1} parent=1 // pred_check_branch
      %10 = sbr.rel (0) target = $region5
    $region4: #{forward.1} parent=1 // pred_region
      %s12 = ssub.s32 128, 128
      %13 = vsyncadd [#allocation3], %s12
      %s15 = sshll.u32 [#allocation2], 4
      %s16 = int_to_ptr.vmem [resolvable:$true] %s15
      %18 = dma.hbm_to_vmem [thread:$0]  %s0, 128, %s16, [#allocation3]
    $region5: #{forward.1} parent=1 // pred_fallthru
      _
    // Predicated region
    $region6: #{forward.1} parent=1 // pred_check
      _
    $region7: #{forward.1} parent=1 // pred_check_branch
      %20 = sbr.rel (0) target = $region9
    $region8: #{forward.1} parent=1 // pred_region
      %s22 = ssub.s32 2816, 2816
      %23 = vsyncadd [#allocation5], %s22
      %s24 = sshll.u32 [#allocation4], 4
      %s25 = int_to_ptr.vmem [resolvable:$true] %s24
      %30 = dma.hbm_to_vmem [thread:$0]  %s1, 2816, %s25, [#allocation5], 128, 128, 8
    $region9: #{forward.1} parent=1 // pred_fallthru
      _
    // Predicated region
    $region10: #{forward.1} parent=1 // pred_check
      _
    $region11: #{forward.1} parent=1 // pred_check_branch
      %32 = sbr.rel (0) target = $region13
    $region12: #{forward.1} parent=1 // pred_region
      %33 = dma.done [#allocation3], 128
    $region13: #{forward.1} parent=1 // pred_fallthru
      _
    // Predicated region
    $region14: #{forward.1} parent=1 // pred_check
      _
    $region15: #{forward.1} parent=1 // pred_check_branch
      %35 = sbr.rel (0) target = $region17
    $region16: #{forward.1} parent=1 // pred_region
      %36 = dma.done [#allocation5], 2816
    $region17: #{forward.1} parent=1 // pred_fallthru
      _
    %v37 = vld [vmem:[#allocation2] sm:$0xff]
    %v38 = vlaneseq
    %v39 = vand.u32 %v38, 127
    %v40 = vld [vmem:[#allocation4] sm:$0xff]
    %v41 = vld [vmem:[#allocation4 + $0x8] sm:$0xff]
    %v42 = vld [vmem:[#allocation4 + $0x10] sm:$0xff]
    %v43 = vld [vmem:[#allocation4 + $0x18] sm:$0xff]
    %v44 = vld [vmem:[#allocation4 + $0x20] sm:$0x7]
    %v45 = vlaneseq
    %v46 = vshrl.u32 %v45, 7
    %v47 = vsub.s32 0, %v46
    %v48 = vrot.slane %v44, %v47
    %vm49 = vcmask 261120
    %v51 = vsel %vm49, %v37, 0
    %53 = vmatprep.subr.mxu0 0.0
    %54 = vmatpush1.msra.mxu0 0.0
    %55 = vmatprep.subr.mxu0 0.0
    %56 = vmatpush1.msra.mxu0 0.0
    %57 = vmatprep.subr.mxu0 0.0
    %58 = vmatpush1.msra.mxu0 0.0
    %59 = vmatprep.subr.mxu0 0.0
    %60 = vmatpush1.msra.mxu0 0.0
    %61 = vmatprep.subr.mxu0 0.0
    %62 = vmatpush1.msra.mxu0 0.0
    %63 = vmatprep.subr.mxu0 0.0
    %64 = vmatpush1.msra.mxu0 0.0
    %65 = vmatprep.subr.mxu0 0.0
    %66 = vmatpush1.msra.mxu0 0.0
    %67 = vmatprep.subr.mxu0 0.0
    %68 = vmatpush1.msra.mxu0 0.0
    %69 = vmatprep.subr.mxu0 0.0
    %70 = vmatpush1.msra.mxu0 0.0
    %71 = vmatprep.subr.mxu0 0.0
    %72 = vmatpush1.msra.mxu0 0.0
    %73 = vmatprep.subr.mxu0 0.0
    %74 = vmatpush1.msra.mxu0 0.0
    %75 = vmatprep.subr.mxu0 0.0
    %76 = vmatpush1.msra.mxu0 0.0
    %77 = vmatprep.subr.mxu0 0.0
    %78 = vmatpush1.msra.mxu0 %v43
    %79 = vmatprep.subr.mxu0 0.0
    %80 = vmatpush1.msra.mxu0 %v42
    %81 = vmatprep.subr.mxu0 0.0
    %82 = vmatpush1.msra.mxu0 %v41
    %83 = vmatprep.subr.mxu0 0.0
    %84 = vmatpush1.msra.mxu0 %v40
    %85 = vmatprep.subr.mxu0 0.0
    %86 = vmatpush2.msra.mxu0 0.0
    %87 = vmatprep.subr.mxu0 0.0
    %88 = vmatpush2.msra.mxu0 0.0
    %89 = vmatprep.subr.mxu0 0.0
    %90 = vmatpush2.msra.mxu0 0.0
    %91 = vmatprep.subr.mxu0 0.0
    %92 = vmatpush2.msra.mxu0 0.0
    %93 = vmatprep.subr.mxu0 0.0
    %94 = vmatpush2.msra.mxu0 0.0
    %95 = vmatprep.subr.mxu0 0.0
    %96 = vmatpush2.msra.mxu0 0.0
    %97 = vmatprep.subr.mxu0 0.0
    %98 = vmatpush2.msra.mxu0 0.0
    %99 = vmatprep.subr.mxu0 0.0
    %100 = vmatpush2.msra.mxu0 0.0
    %101 = vmatprep.subr.mxu0 0.0
    %102 = vmatpush2.msra.mxu0 0.0
    %103 = vmatprep.subr.mxu0 0.0
    %104 = vmatpush2.msra.mxu0 0.0
    %105 = vmatprep.subr.mxu0 0.0
    %106 = vmatpush2.msra.mxu0 0.0
    %107 = vmatprep.subr.mxu0 0.0
    %108 = vmatpush2.msra.mxu0 0.0
    %109 = vmatprep.subr.mxu0 0.0
    %110 = vmatpush2.msra.mxu0 0.0
    %111 = vmatprep.subr.mxu0 0.0
    %112 = vmatpush2.msra.mxu0 0.0
    %113 = vmatprep.subr.mxu0 0.0
    %114 = vmatpush2.msra.mxu0 0.0
    %115 = vmatprep.subr.mxu0 0.0
    %116 = vmatpush2.msra.mxu0 0.0
    %117 = vmatprep.mubr.f32.mxu0 0.0
    %118 = vmatmul.mubr.f32.gmra.mxu0 %v51
    %v119 = vpop.f32.mrf.mxu0
    %v120 = vadd.f32 %v48, %v119
    %v121 = vpop.f32.mrf.mxu0
    %122 = vdwg.mxu0
    %vm123 = vcmp.lt.s32.totalorder %v39, 32
    %vm124 = vcmp.ge.s32.totalorder %v39, 32
    %vm125 = vcmp.lt.s32.totalorder %v39, 64
    %vm126 = vmand %vm124, %vm125
    %v127 = vsel %vm123, %v120, 0.0
    %128 = vadd.xlane.f32.xlu0 %v127
    %v129 = vpop.xlane.xlu0 %128
    %v130 = vmul.f32 %v129, 0.03125
    %v131 = vsel %vm126, %v120, 0.0
    %132 = vadd.xlane.f32.xlu0 %v131
    %v133 = vpop.xlane.xlu0 %132
    %v134 = vmul.f32 %v133, 0.03125
    %v135 = vsel %vm123, %v130, %v134
    %v136 = vsub.f32 %v120, %v135
    %v137 = vmul.f32 %v136, %v136
    %v138 = vsel %vm123, %v137, 0.0
    %139 = vadd.xlane.f32.xlu0 %v138
    %v140 = vpop.xlane.xlu0 %139
    %v141 = vmul.f32 %v140, 0.03125
    %v142 = vsel %vm126, %v137, 0.0
    %143 = vadd.xlane.f32.xlu0 %v142
    %v144 = vpop.xlane.xlu0 %143
    %v145 = vmul.f32 %v144, 0.03125
    %v146 = vsel %vm123, %v141, %v145
    %v147 = vadd.f32 %v146, 1e-05
    %v148 = vrsqrt.pop %v147
    %v149 = vmul.f32 %v136, %v148
    %v150 = vlaneseq
    %v151 = vshrl.u32 %v150, 7
    %v152 = vsub.s32 1, %v151
    %v153 = vrot.slane %v44, %v152
    %v154 = vmul.f32 %v149, %v153
    %v155 = vlaneseq
    %v156 = vshrl.u32 %v155, 7
    %v157 = vsub.s32 2, %v156
    %v158 = vrot.slane %v44, %v157
    %v159 = vadd.f32 %v154, %v158
    %v160 = vmax.f32 %v159, 0.0
    %v161 = vsel %vm125, %v160, 0.0
    %v162 = vld [vmem:[#allocation4 + $0x28] sm:$0xff]
    %v163 = vld [vmem:[#allocation4 + $0x30] sm:$0xff]
    %v164 = vld [vmem:[#allocation4 + $0x38] sm:$0xff]
    %v165 = vld [vmem:[#allocation4 + $0x40] sm:$0xff]
    %v166 = vld [vmem:[#allocation4 + $0x48] sm:$0xff]
    %v167 = vld [vmem:[#allocation4 + $0x50] sm:$0xff]
    %v168 = vld [vmem:[#allocation4 + $0x58] sm:$0xff]
    %v169 = vld [vmem:[#allocation4 + $0x60] sm:$0xff]
    %v170 = vld [vmem:[#allocation4 + $0x68] sm:$0xff]
    %v171 = vld [vmem:[#allocation4 + $0x70] sm:$0xff]
    %v172 = vld [vmem:[#allocation4 + $0x78] sm:$0xff]
    %v173 = vld [vmem:[#allocation4 + $0x80] sm:$0xff]
    %v174 = vld [vmem:[#allocation4 + $0x88] sm:$0xff]
    %v175 = vld [vmem:[#allocation4 + $0x90] sm:$0xff]
    %v176 = vld [vmem:[#allocation4 + $0x98] sm:$0xff]
    %v177 = vld [vmem:[#allocation4 + $0xa0] sm:$0xff]
    %v178 = vld [vmem:[#allocation4 + $0xa8] sm:$0x7]
    %v179 = vlaneseq
    %v180 = vshrl.u32 %v179, 7
    %v181 = vsub.s32 0, %v180
    %v182 = vrot.slane %v178, %v181
    %183 = vmatprep.subr.mxu0 0.0
    %184 = vmatpush1.msra.mxu0 %v177
    %185 = vmatprep.subr.mxu0 0.0
    %186 = vmatpush1.msra.mxu0 %v176
    %187 = vmatprep.subr.mxu0 0.0
    %188 = vmatpush1.msra.mxu0 %v175
    %189 = vmatprep.subr.mxu0 0.0
    %190 = vmatpush1.msra.mxu0 %v174
    %191 = vmatprep.subr.mxu0 0.0
    %192 = vmatpush1.msra.mxu0 %v173
    %193 = vmatprep.subr.mxu0 0.0
    %194 = vmatpush1.msra.mxu0 %v172
    %195 = vmatprep.subr.mxu0 0.0
    %196 = vmatpush1.msra.mxu0 %v171
    %197 = vmatprep.subr.mxu0 0.0
    %198 = vmatpush1.msra.mxu0 %v170
    %199 = vmatprep.subr.mxu0 0.0
    %200 = vmatpush1.msra.mxu0 %v169
    %201 = vmatprep.subr.mxu0 0.0
    %202 = vmatpush1.msra.mxu0 %v168
    %203 = vmatprep.subr.mxu0 0.0
    %204 = vmatpush1.msra.mxu0 %v167
    %205 = vmatprep.subr.mxu0 0.0
    %206 = vmatpush1.msra.mxu0 %v166
    %207 = vmatprep.subr.mxu0 0.0
    %208 = vmatpush1.msra.mxu0 %v165
    %209 = vmatprep.subr.mxu0 0.0
    %210 = vmatpush1.msra.mxu0 %v164
    %211 = vmatprep.subr.mxu0 0.0
    %212 = vmatpush1.msra.mxu0 %v163
    %213 = vmatprep.subr.mxu0 0.0
    %214 = vmatpush1.msra.mxu0 %v162
    %215 = vmatprep.subr.mxu0 0.0
    %216 = vmatpush2.msra.mxu0 0.0
    %217 = vmatprep.subr.mxu0 0.0
    %218 = vmatpush2.msra.mxu0 0.0
    %219 = vmatprep.subr.mxu0 0.0
    %220 = vmatpush2.msra.mxu0 0.0
    %221 = vmatprep.subr.mxu0 0.0
    %222 = vmatpush2.msra.mxu0 0.0
    %223 = vmatprep.subr.mxu0 0.0
    %224 = vmatpush2.msra.mxu0 0.0
    %225 = vmatprep.subr.mxu0 0.0
    %226 = vmatpush2.msra.mxu0 0.0
    %227 = vmatprep.subr.mxu0 0.0
    %228 = vmatpush2.msra.mxu0 0.0
    %229 = vmatprep.subr.mxu0 0.0
    %230 = vmatpush2.msra.mxu0 0.0
    %231 = vmatprep.subr.mxu0 0.0
    %232 = vmatpush2.msra.mxu0 0.0
    %233 = vmatprep.subr.mxu0 0.0
    %234 = vmatpush2.msra.mxu0 0.0
    %235 = vmatprep.subr.mxu0 0.0
    %236 = vmatpush2.msra.mxu0 0.0
    %237 = vmatprep.subr.mxu0 0.0
    %238 = vmatpush2.msra.mxu0 0.0
    %239 = vmatprep.subr.mxu0 0.0
    %240 = vmatpush2.msra.mxu0 0.0
    %241 = vmatprep.subr.mxu0 0.0
    %242 = vmatpush2.msra.mxu0 0.0
    %243 = vmatprep.subr.mxu0 0.0
    %244 = vmatpush2.msra.mxu0 0.0
    %245 = vmatprep.subr.mxu0 0.0
    %246 = vmatpush2.msra.mxu0 0.0
    %247 = vmatprep.mubr.f32.mxu0 0.0
    %248 = vmatmul.mubr.f32.gmra.mxu0 %v161
    %v249 = vpop.f32.mrf.mxu0
    %v250 = vadd.f32 %v182, %v249
    %v251 = vpop.f32.mrf.mxu0
    %252 = vdwg.mxu0
    %v253 = vsel %vm123, %v250, 0.0
    %254 = vadd.xlane.f32.xlu0 %v253
    %v255 = vpop.xlane.xlu0 %254
    %v256 = vmul.f32 %v255, 0.03125
    %v257 = vsel %vm126, %v250, 0.0
    %258 = vadd.xlane.f32.xlu0 %v257
    %v259 = vpop.xlane.xlu0 %258
    %v260 = vmul.f32 %v259, 0.03125
    %v261 = vsel %vm123, %v256, %v260
    %v262 = vsub.f32 %v250, %v261
    %v263 = vmul.f32 %v262, %v262
    %v264 = vsel %vm123, %v263, 0.0
    %265 = vadd.xlane.f32.xlu0 %v264
    %v266 = vpop.xlane.xlu0 %265
    %v267 = vmul.f32 %v266, 0.03125
    %v268 = vsel %vm126, %v263, 0.0
    %269 = vadd.xlane.f32.xlu0 %v268
    %v270 = vpop.xlane.xlu0 %269
    %v271 = vmul.f32 %v270, 0.03125
    %v272 = vsel %vm123, %v267, %v271
    %v273 = vadd.f32 %v272, 1e-05
    %v274 = vrsqrt.pop %v273
    %v275 = vmul.f32 %v262, %v274
    %v276 = vlaneseq
    %v277 = vshrl.u32 %v276, 7
    %v278 = vsub.s32 1, %v277
    %v279 = vrot.slane %v178, %v278
    %v280 = vmul.f32 %v275, %v279
    %v281 = vlaneseq
    %v282 = vshrl.u32 %v281, 7
    %v283 = vsub.s32 2, %v282
    %v284 = vrot.slane %v178, %v283
    %v285 = vadd.f32 %v280, %v284
    %v286 = vmax.f32 %v285, 0.0
    %v287 = vsel %vm125, %v286, 0.0
    %288 = vst [vmem:[%s2] sm:$0xff] %v287
    // Predicated region
    $region18: #{forward.1} parent=1 // pred_check
      _
    $region19: #{forward.1} parent=1 // pred_check_branch
      %290 = sbr.rel (0) target = $region21
    $region20: #{forward.1} parent=1 // pred_region
      _
    $region21: #{forward.1} parent=1 // pred_fallthru
      _
    // Predicated region
    $region22: #{forward.1} parent=1 // pred_check
      _
    $region23: #{forward.1} parent=1 // pred_check_branch
      %292 = sbr.rel (0) target = $region25
    $region24: #{forward.1} parent=1 // pred_region
      _
    $region25: #{forward.1} parent=1 // pred_fallthru
      _
    %293 = vsyncpa [#allocation3], 1
    %294 = vsyncpa [#allocation5], 1

</llo_original>
